<compile_context>
chip_gen: v7x
topology: tpu7x:2x2x1
jax: 0.10.0
libtpu: 0.0.40
codegen_flags: <defaults>
</compile_context>

<pallas_src>
import jax
import jax.numpy as jnp
from jax.experimental import pallas as pl
from jax.experimental.pallas import tpu as pltpu

# ---- module config (sf = 1, sl = sw = 28) ----
CONF = [28 * 28, 100, 10]          # [784, 100, 10]
K = CONF[0]                        # 784 input features
H = CONF[1]                        # 100 hidden
O = CONF[2]                        # 10 outputs
SUBLANE = 8
H_PAD = 128                        # hidden lane-padded 100 -> 128
MAX_TILE_B = 1024                  # x tile: 1024 x 784 f32 ~= 3.1 MiB (x2 buffers)
VMEM_LIMIT_BYTES = 48 * 1024 * 1024  # headroom on all gens; < v7x's 64 MiB/TC


def _round_up(n, m):
    return (n + m - 1) // m * m


def net_kernel(x_ref, img_ref, w1_ref, b1_ref, w2_ref, b2_ref, o_ref):
    # x = clamp(x + img, 0, 1)              (VPU, f32)
    x = jnp.clip(x_ref[...] + img_ref[...], 0.0, 1.0)
    # hidden = relu(x @ W1 + b1)            (MXU, f32 accumulation)
    h = jnp.dot(x, w1_ref[...], preferred_element_type=jnp.float32) + b1_ref[...]
    h = jnp.maximum(h, 0.0)
    # logits = h @ W2 + b2                  (narrow-N matmul, stored 10-wide)
    o = jnp.dot(h, w2_ref[...], preferred_element_type=jnp.float32) + b2_ref[...]
    o_ref[...] = o.astype(o_ref.dtype)


def prepare_params(img, w1, b1, w2, b2):
    """One-time parameter prep (hoisted out of the per-call hot path).

    Invariant the kernel relies on: columns H..H_PAD-1 of W1/b1 and rows
    H..H_PAD-1 of W2 are exactly zero, so the padded hidden lanes contribute
    nothing to the output. Keep this if the padding is ever changed.
    Weights are stored (in, out) so the kernel does x @ W directly.
    """
    img_p = img.reshape(1, K).astype(jnp.float32)
    w1_p = jnp.zeros((K, H_PAD), jnp.float32).at[:, :H].set(w1.astype(jnp.float32))
    b1_p = jnp.zeros((1, H_PAD), jnp.float32).at[:, :H].set(
        b1.reshape(1, H).astype(jnp.float32))
    w2_p = jnp.zeros((H_PAD, O), jnp.float32).at[:H, :].set(w2.astype(jnp.float32))
    b2_p = b2.reshape(1, O).astype(jnp.float32)
    return img_p, w1_p, b1_p, w2_p, b2_p


def net_forward(x, params, *, max_tile_b=MAX_TILE_B):
    """Forward pass of Net.

    x: (B, 784) float32; params = prepare_params(...) output.
    Returns (B, 10) float32 logits.
    """
    img_p, w1_p, b1_p, w2_p, b2_p = params
    B = x.shape[0]
    x = x.astype(jnp.float32)

    # Only tiny batches (< one sublane) get padded; everything else relies on
    # Pallas partial-last-block masking (rows are independent), avoiding the
    # full-array concatenate copy on the dominant HBM stream.
    pad_rows = SUBLANE - B if B < SUBLANE else 0
    if pad_rows:
        x = jnp.concatenate([x, jnp.zeros((pad_rows, K), jnp.float32)], axis=0)
    Bp = B + pad_rows

    # Batch tile: multiple of the 8-row sublane, capped by the VMEM budget, and
    # sized so large batches get >= 2 grid steps (both v7x TensorCores work).
    half = -(-Bp // 2)
    tile_b = max(SUBLANE, min(max_tile_b, _round_up(half, SUBLANE)))
    grid = (pl.cdiv(Bp, tile_b),)

    flops = 2 * Bp * (K * H_PAD + H_PAD * O)
    bytes_accessed = (Bp * K * 4            # x stream (f32)
                      + K * 4               # img
                      + K * H_PAD * 4       # W1
                      + H_PAD * 4           # b1
                      + H_PAD * O * 4       # W2
                      + O * 4               # b2
                      + Bp * O * 4)         # out (10-wide)

    out = pl.pallas_call(
        net_kernel,
        out_shape=jax.ShapeDtypeStruct((Bp, O), jnp.float32),
        grid_spec=pltpu.PrefetchScalarGridSpec(
            num_scalar_prefetch=0,
            grid=grid,
            in_specs=[
                pl.BlockSpec((tile_b, K), lambda i: (i, 0)),     # x (streamed)
                pl.BlockSpec((1, K), lambda i: (0, 0)),          # img (resident)
                pl.BlockSpec((K, H_PAD), lambda i: (0, 0)),      # W1 (resident)
                pl.BlockSpec((1, H_PAD), lambda i: (0, 0)),      # b1 (resident)
                pl.BlockSpec((H_PAD, O), lambda i: (0, 0)),      # W2 (resident)
                pl.BlockSpec((1, O), lambda i: (0, 0)),          # b2 (resident)
            ],
            out_specs=pl.BlockSpec((tile_b, O), lambda i: (i, 0)),
        ),
        compiler_params=pltpu.CompilerParams(
            dimension_semantics=("parallel",),
            vmem_limit_bytes=VMEM_LIMIT_BYTES),
        cost_estimate=pl.CostEstimate(flops=flops, transcendentals=0,
                                      bytes_accessed=bytes_accessed),
    )(x, img_p, w1_p, b1_p, w2_p, b2_p)

    return out[:B] if pad_rows else out


def init_params(key):
    """Deterministic init mimicking nn.Linear default (U(-1/sqrt(in), 1/sqrt(in)))
    and nn.Parameter(torch.zeros(1, conf[0])) for img. Weights stored (in, out)."""
    k1, k2, k3, k4 = jax.random.split(key, 4)
    bound1 = 1.0 / jnp.sqrt(jnp.float32(K))
    bound2 = 1.0 / jnp.sqrt(jnp.float32(H))
    img = jnp.zeros((1, K), jnp.float32)
    w1 = jax.random.uniform(k1, (K, H), jnp.float32, -bound1, bound1)
    b1 = jax.random.uniform(k2, (1, H), jnp.float32, -bound1, bound1)
    w2 = jax.random.uniform(k3, (H, O), jnp.float32, -bound2, bound2)
    b2 = jax.random.uniform(k4, (1, O), jnp.float32, -bound2, bound2)
    return img, w1, b1, w2, b2


if __name__ == "__main__":
    key = jax.random.PRNGKey(0)
    kx, kp = jax.random.split(key)

    B = 2
    x = jax.random.uniform(kx, (B, K), jnp.float32)   # MNIST-like pixels in [0, 1]
    img, w1, b1, w2, b2 = init_params(kp)

    params = prepare_params(img, w1, b1, w2, b2)       # one-time prep
    out = net_forward(x, params)
    jax.block_until_ready(out)

    # sanity check vs. pure-JAX f32 reference
    xr = jnp.clip(x + img, 0.0, 1.0)
    hr = jnp.maximum(xr @ w1 + b1, 0.0)
    ref = hr @ w2 + b2
    assert out.shape == (B, O)
    assert jnp.allclose(out, ref, atol=2e-2, rtol=2e-2), (
        float(jnp.max(jnp.abs(out - ref))))

    print("KERNEL_OK")
</pallas_src>

<mosaic_0001>
module attributes {stable_mosaic.version = 11 : i64} {
  func.func @net_kernel(%arg0: i32, %arg1: memref<8x784xf32, #tpu.memory_space<vmem>>, %arg2: memref<1x784xf32, #tpu.memory_space<vmem>>, %arg3: memref<784x128xf32, #tpu.memory_space<vmem>>, %arg4: memref<1x128xf32, #tpu.memory_space<vmem>>, %arg5: memref<128x10xf32, #tpu.memory_space<vmem>>, %arg6: memref<1x10xf32, #tpu.memory_space<vmem>>, %arg7: memref<8x10xf32, #tpu.memory_space<vmem>>) attributes {dimension_semantics = [#tpu.dimension_semantics<parallel>], iteration_bounds = array<i64: 1>, scalar_prefetch = 0 : i64, scratch_operands = 0 : i64, tpu.core_type = #tpu.core_type<tc>, window_params = [{transform_indices = @transform_0, window_bounds = array<i64: 8, 784>}, {pipeline_mode = #tpu.pipeline_mode<synchronous>, transform_indices = @transform_1, window_bounds = array<i64: 1, 784>}, {pipeline_mode = #tpu.pipeline_mode<synchronous>, transform_indices = @transform_2, window_bounds = array<i64: 784, 128>}, {pipeline_mode = #tpu.pipeline_mode<synchronous>, transform_indices = @transform_3, window_bounds = array<i64: 1, 128>}, {pipeline_mode = #tpu.pipeline_mode<synchronous>, transform_indices = @transform_4, window_bounds = array<i64: 128, 10>}, {pipeline_mode = #tpu.pipeline_mode<synchronous>, transform_indices = @transform_5, window_bounds = array<i64: 1, 10>}, {transform_indices = @transform_6, window_bounds = array<i64: 8, 10>}]} {
    %c0 = arith.constant 0 : index
    %c0_0 = arith.constant 0 : index
    %0 = vector.load %arg1[%c0, %c0_0] : memref<8x784xf32, #tpu.memory_space<vmem>>, vector<8x784xf32>
    %c0_1 = arith.constant 0 : index
    %c0_2 = arith.constant 0 : index
    %1 = vector.load %arg2[%c0_1, %c0_2] : memref<1x784xf32, #tpu.memory_space<vmem>>, vector<1x784xf32>
    %2 = vector.broadcast %1 : vector<1x784xf32> to vector<8x784xf32>
    %3 = arith.addf %0, %2 : vector<8x784xf32>
    %cst = arith.constant 0.000000e+00 : f32
    %cst_3 = arith.constant 1.000000e+00 : f32
    %4 = vector.broadcast %cst : f32 to vector<8x784xf32>
    %5 = arith.maximumf %4, %3 : vector<8x784xf32>
    %6 = vector.broadcast %cst_3 : f32 to vector<8x784xf32>
    %7 = arith.minimumf %6, %5 : vector<8x784xf32>
    %c0_4 = arith.constant 0 : index
    %c0_5 = arith.constant 0 : index
    %8 = vector.load %arg3[%c0_4, %c0_5] : memref<784x128xf32, #tpu.memory_space<vmem>>, vector<784x128xf32>
    %cst_6 = arith.constant dense<0.000000e+00> : vector<8x128xf32>
    %9 = tpu.matmul %7, %8, %cst_6 {dimension_numbers = #tpu.dot_dimension_numbers<[1], [0], [0], [1], [0, 0, 1, 1], [], []>} : vector<8x784xf32>, vector<784x128xf32>, vector<8x128xf32> -> vector<8x128xf32>
    %c0_7 = arith.constant 0 : index
    %c0_8 = arith.constant 0 : index
    %10 = vector.load %arg4[%c0_7, %c0_8] : memref<1x128xf32, #tpu.memory_space<vmem>>, vector<1x128xf32>
    %11 = vector.broadcast %10 : vector<1x128xf32> to vector<8x128xf32>
    %12 = arith.addf %9, %11 : vector<8x128xf32>
    %cst_9 = arith.constant 0.000000e+00 : f32
    %13 = vector.broadcast %cst_9 : f32 to vector<8x128xf32>
    %14 = arith.maximumf %12, %13 : vector<8x128xf32>
    %c0_10 = arith.constant 0 : index
    %c0_11 = arith.constant 0 : index
    %15 = vector.load %arg5[%c0_10, %c0_11] : memref<128x10xf32, #tpu.memory_space<vmem>>, vector<128x10xf32>
    %cst_12 = arith.constant dense<0.000000e+00> : vector<8x10xf32>
    %16 = tpu.matmul %14, %15, %cst_12 {dimension_numbers = #tpu.dot_dimension_numbers<[1], [0], [0], [1], [0, 0, 1, 1], [], []>} : vector<8x128xf32>, vector<128x10xf32>, vector<8x10xf32> -> vector<8x10xf32>
    %c0_13 = arith.constant 0 : index
    %c0_14 = arith.constant 0 : index
    %17 = vector.load %arg6[%c0_13, %c0_14] : memref<1x10xf32, #tpu.memory_space<vmem>>, vector<1x10xf32>
    %18 = vector.broadcast %17 : vector<1x10xf32> to vector<8x10xf32>
    %19 = arith.addf %16, %18 : vector<8x10xf32>
    %c0_15 = arith.constant 0 : index
    %c0_16 = arith.constant 0 : index
    %20 = vector.load %arg7[%c0_15, %c0_16] : memref<8x10xf32, #tpu.memory_space<vmem>>, vector<8x10xf32>
    tpu.vector_store %arg7[%c0_15, %c0_16], %19 {strides = array<i32>} : memref<8x10xf32, #tpu.memory_space<vmem>>, vector<8x10xf32>,
    return
  }
  func.func @transform_0(%arg0: i32) -> (i32, i32) {
    %c0_i32 = arith.constant 0 : i32
    %c0_i32_0 = arith.constant 0 : i32
    return %arg0, %c0_i32 : i32, i32
  }
  func.func @transform_1(%arg0: i32) -> (i32, i32) {
    %c0_i32 = arith.constant 0 : i32
    %c0_i32_0 = arith.constant 0 : i32
    %c0_i32_1 = arith.constant 0 : i32
    return %c0_i32, %c0_i32_0 : i32, i32
  }
  func.func @transform_2(%arg0: i32) -> (i32, i32) {
    %c0_i32 = arith.constant 0 : i32
    %c0_i32_0 = arith.constant 0 : i32
    %c0_i32_1 = arith.constant 0 : i32
    return %c0_i32, %c0_i32_0 : i32, i32
  }
  func.func @transform_3(%arg0: i32) -> (i32, i32) {
    %c0_i32 = arith.constant 0 : i32
    %c0_i32_0 = arith.constant 0 : i32
    %c0_i32_1 = arith.constant 0 : i32
    return %c0_i32, %c0_i32_0 : i32, i32
  }
  func.func @transform_4(%arg0: i32) -> (i32, i32) {
    %c0_i32 = arith.constant 0 : i32
    %c0_i32_0 = arith.constant 0 : i32
    %c0_i32_1 = arith.constant 0 : i32
    return %c0_i32, %c0_i32_0 : i32, i32
  }
  func.func @transform_5(%arg0: i32) -> (i32, i32) {
    %c0_i32 = arith.constant 0 : i32
    %c0_i32_0 = arith.constant 0 : i32
    %c0_i32_1 = arith.constant 0 : i32
    return %c0_i32, %c0_i32_0 : i32, i32
  }
  func.func @transform_6(%arg0: i32) -> (i32, i32) {
    %c0_i32 = arith.constant 0 : i32
    %c0_i32_0 = arith.constant 0 : i32
    return %arg0, %c0_i32 : i32, i32
  }
}

</mosaic_0001>

<llo_original>
// kernel: tpu_custom_call.1
$region0: #{tpu_custom_call.1}
  #allocation0 [shape = 'u32[]', space=smem, size = 0x4, offset = 0x4, fixed_abs, tag = 'smem constant byte address 0x4 - core index']
  #allocation1 [shape = 'u32[144,128]{1,0:T(1,128)}', space=vmem, size = 0x12000, scoped, tag = 'internal scratch']
  %s0 = inlined_call_operand.vmem [shape: f32[8,784], index: 0, kind: input, shape index: {}]
  %s1 = inlined_call_operand.vmem [shape: f32[1,784], index: 1, kind: input, shape index: {}]
  %s2 = inlined_call_operand.hbm [shape: f32[784,128], index: 2, kind: input, shape index: {}]
  %s3 = inlined_call_operand.vmem [shape: f32[1,128], index: 3, kind: input, shape index: {}]
  %s4 = inlined_call_operand.vmem [shape: f32[128,10], index: 4, kind: input, shape index: {}]
  %s5 = inlined_call_operand.vmem [shape: f32[1,10], index: 5, kind: input, shape index: {}]
  %s6 = inlined_call_operand.hbm [shape: f32[8,10], index: 6, kind: output, shape index: {}]
  %s7 = sld [smem:[#allocation0]]
  $region38: #{tpu_custom_call.1} parent=0
    _
  %s9 = ssub.s32 1, %s7
  %s10 = scalar_select 0, %s9, %s7
  $region1: #{tpu_custom_call.1} parent=0
    #allocation2 [shape = 'u8[401408]{0}', space=vmem, size = 0x62000, scoped, tag = 'input window, operand 2, single buffered']
    #allocation3 [shape = 's32[1]{0}', space=sflag, size = 0x4, scoped, tag = 'scoped memory for tpu_custom_call.1']
    #allocation4 [shape = 's32[1]{0}', space=sflag, size = 0x4, scoped, tag = 'scoped memory for tpu_custom_call.1']
    #allocation5 [shape = 'u8[4096]{0}', space=vmem, size = 0x1000, scoped, tag = 'output window, operand 0, single buffered']
    %11 = vsyncpa [#allocation3], 0
    %12 = vsyncpa [#allocation4], 0
    // Predicated region
    $region2: #{tpu_custom_call.1} parent=1 // pred_check
      _
    $region3: #{tpu_custom_call.1} parent=1 // pred_check_branch
      %14 = sbr.rel (0) target = $region5
    $region4: #{tpu_custom_call.1} parent=1 // pred_region
      _
    $region5: #{tpu_custom_call.1} parent=1 // pred_fallthru
      _
    // Predicated region
    $region6: #{tpu_custom_call.1} parent=1 // pred_check
      _
    $region7: #{tpu_custom_call.1} parent=1 // pred_check_branch
      %16 = sbr.rel (0) target = $region9
    $region8: #{tpu_custom_call.1} parent=1 // pred_region
      _
    $region9: #{tpu_custom_call.1} parent=1 // pred_fallthru
      _
    // Predicated region
    $region10: #{tpu_custom_call.1} parent=1 // pred_check
      _
    $region11: #{tpu_custom_call.1} parent=1 // pred_check_branch
      %18 = sbr.rel (0) target = $region13
    $region12: #{tpu_custom_call.1} parent=1 // pred_region
      %s20 = ssub.s32 12544, 12544
      %21 = vsyncadd [#allocation3], %s20
      %s22 = sshll.u32 [#allocation2], 4
      %s23 = int_to_ptr.vmem [resolvable:$true] %s22
      %28 = dma.hbm_to_vmem [thread:$0]  %s2, 12544, %s23, [#allocation3], 128, 128, 8
    $region13: #{tpu_custom_call.1} parent=1 // pred_fallthru
      _
    // Predicated region
    $region14: #{tpu_custom_call.1} parent=1 // pred_check
      _
    $region15: #{tpu_custom_call.1} parent=1 // pred_check_branch
      %30 = sbr.rel (0) target = $region17
    $region16: #{tpu_custom_call.1} parent=1 // pred_region
      _
    $region17: #{tpu_custom_call.1} parent=1 // pred_fallthru
      _
    // Predicated region
    $region18: #{tpu_custom_call.1} parent=1 // pred_check
      _
    $region19: #{tpu_custom_call.1} parent=1 // pred_check_branch
      %32 = sbr.rel (0) target = $region21
    $region20: #{tpu_custom_call.1} parent=1 // pred_region
      _
    $region21: #{tpu_custom_call.1} parent=1 // pred_fallthru
      _
    // Predicated region
    $region22: #{tpu_custom_call.1} parent=1 // pred_check
      _
    $region23: #{tpu_custom_call.1} parent=1 // pred_check_branch
      %34 = sbr.rel (0) target = $region25
    $region24: #{tpu_custom_call.1} parent=1 // pred_region
      _
    $region25: #{tpu_custom_call.1} parent=1 // pred_fallthru
      _
    // Predicated region
    $region26: #{tpu_custom_call.1} parent=1 // pred_check
      _
    $region27: #{tpu_custom_call.1} parent=1 // pred_check_branch
      %36 = sbr.rel (0) target = $region29
    $region28: #{tpu_custom_call.1} parent=1 // pred_region
      %37 = dma.done [#allocation3], 12544
    $region29: #{tpu_custom_call.1} parent=1 // pred_fallthru
      _
    %v38 = vld [vmem:[%s0] sm:$0xff]
    %v39 = vld [vmem:[%s0 + $0x8] sm:$0xff]
    %v40 = vld [vmem:[%s0 + $0x10] sm:$0xff]
    %v41 = vld [vmem:[%s0 + $0x18] sm:$0xff]
    %v42 = vld [vmem:[%s0 + $0x20] sm:$0xff]
    %v43 = vld [vmem:[%s0 + $0x28] sm:$0xff]
    %v44 = vld [vmem:[%s0 + $0x30] sm:$0xff]
    %v45 = vld [vmem:[%s1] sm:$0x7f]
    %v47 = vlaneseq
    %v48 = vshrl.u32 %v47, 7
    %v49 = vsub.s32 0, %v48
    %v50 = vrot.slane %v45, %v49
    %v51 = vlaneseq
    %v52 = vshrl.u32 %v51, 7
    %v53 = vsub.s32 1, %v52
    %v54 = vrot.slane %v45, %v53
    %v55 = vlaneseq
    %v56 = vshrl.u32 %v55, 7
    %v57 = vsub.s32 2, %v56
    %v58 = vrot.slane %v45, %v57
    %v59 = vlaneseq
    %v60 = vshrl.u32 %v59, 7
    %v61 = vsub.s32 3, %v60
    %v62 = vrot.slane %v45, %v61
    %v63 = vlaneseq
    %v64 = vshrl.u32 %v63, 7
    %v65 = vsub.s32 4, %v64
    %v66 = vrot.slane %v45, %v65
    %v67 = vlaneseq
    %v68 = vshrl.u32 %v67, 7
    %v69 = vsub.s32 5, %v68
    %v70 = vrot.slane %v45, %v69
    %v71 = vlaneseq
    %v72 = vshrl.u32 %v71, 7
    %v73 = vsub.s32 6, %v72
    %v74 = vrot.slane %v45, %v73
    %v82 = vadd.f32 %v38, %v50
    %v83 = vadd.f32 %v39, %v54
    %v84 = vadd.f32 %v40, %v58
    %v85 = vadd.f32 %v41, %v62
    %v86 = vadd.f32 %v42, %v66
    %v87 = vadd.f32 %v43, %v70
    %v88 = vadd.f32 %v44, %v74
    %v89 = vmax.f32 %v82, 0.0
    %v90 = vmax.f32 %v83, 0.0
    %v91 = vmax.f32 %v84, 0.0
    %v92 = vmax.f32 %v85, 0.0
    %v93 = vmax.f32 %v86, 0.0
    %v94 = vmax.f32 %v87, 0.0
    %v95 = vmax.f32 %v88, 0.0
    %v96 = vmin.f32 %v89, 1.0
    %v97 = vmin.f32 %v90, 1.0
    %v98 = vmin.f32 %v91, 1.0
    %v99 = vmin.f32 %v92, 1.0
    %v100 = vmin.f32 %v93, 1.0
    %v101 = vmin.f32 %v94, 1.0
    %v102 = vmin.f32 %v95, 1.0
    %v103 = vld [vmem:[#allocation2] sm:$0xff]
    %v104 = vld [vmem:[#allocation2 + $0x8] sm:$0xff]
    %v105 = vld [vmem:[#allocation2 + $0x10] sm:$0xff]
    %v106 = vld [vmem:[#allocation2 + $0x18] sm:$0xff]
    %v107 = vld [vmem:[#allocation2 + $0x20] sm:$0xff]
    %v108 = vld [vmem:[#allocation2 + $0x28] sm:$0xff]
    %v109 = vld [vmem:[#allocation2 + $0x30] sm:$0xff]
    %v110 = vld [vmem:[#allocation2 + $0x38] sm:$0xff]
    %v111 = vld [vmem:[#allocation2 + $0x40] sm:$0xff]
    %v112 = vld [vmem:[#allocation2 + $0x48] sm:$0xff]
    %v113 = vld [vmem:[#allocation2 + $0x50] sm:$0xff]
    %v114 = vld [vmem:[#allocation2 + $0x58] sm:$0xff]
    %v115 = vld [vmem:[#allocation2 + $0x60] sm:$0xff]
    %v116 = vld [vmem:[#allocation2 + $0x68] sm:$0xff]
    %v117 = vld [vmem:[#allocation2 + $0x70] sm:$0xff]
    %v118 = vld [vmem:[#allocation2 + $0x78] sm:$0xff]
    %v119 = vld [vmem:[#allocation2 + $0x80] sm:$0xff]
    %v120 = vld [vmem:[#allocation2 + $0x88] sm:$0xff]
    %v121 = vld [vmem:[#allocation2 + $0x90] sm:$0xff]
    %v122 = vld [vmem:[#allocation2 + $0x98] sm:$0xff]
    %v123 = vld [vmem:[#allocation2 + $0xa0] sm:$0xff]
    %v124 = vld [vmem:[#allocation2 + $0xa8] sm:$0xff]
    %v125 = vld [vmem:[#allocation2 + $0xb0] sm:$0xff]
    %v126 = vld [vmem:[#allocation2 + $0xb8] sm:$0xff]
    %v127 = vld [vmem:[#allocation2 + $0xc0] sm:$0xff]
    %v128 = vld [vmem:[#allocation2 + $0xc8] sm:$0xff]
    %v129 = vld [vmem:[#allocation2 + $0xd0] sm:$0xff]
    %v130 = vld [vmem:[#allocation2 + $0xd8] sm:$0xff]
    %v131 = vld [vmem:[#allocation2 + $0xe0] sm:$0xff]
    %v132 = vld [vmem:[#allocation2 + $0xe8] sm:$0xff]
    %v133 = vld [vmem:[#allocation2 + $0xf0] sm:$0xff]
    %v134 = vld [vmem:[#allocation2 + $0xf8] sm:$0xff]
    %v135 = vld [vmem:[#allocation2 + $0x100] sm:$0xff]
    %v136 = vld [vmem:[#allocation2 + $0x108] sm:$0xff]
    %v137 = vld [vmem:[#allocation2 + $0x110] sm:$0xff]
    %v138 = vld [vmem:[#allocation2 + $0x118] sm:$0xff]
    %v139 = vld [vmem:[#allocation2 + $0x120] sm:$0xff]
    %v140 = vld [vmem:[#allocation2 + $0x128] sm:$0xff]
    %v141 = vld [vmem:[#allocation2 + $0x130] sm:$0xff]
    %v142 = vld [vmem:[#allocation2 + $0x138] sm:$0xff]
    %v143 = vld [vmem:[#allocation2 + $0x140] sm:$0xff]
    %v144 = vld [vmem:[#allocation2 + $0x148] sm:$0xff]
    %v145 = vld [vmem:[#allocation2 + $0x150] sm:$0xff]
    %v146 = vld [vmem:[#allocation2 + $0x158] sm:$0xff]
    %v147 = vld [vmem:[#allocation2 + $0x160] sm:$0xff]
    %v148 = vld [vmem:[#allocation2 + $0x168] sm:$0xff]
    %v149 = vld [vmem:[#allocation2 + $0x170] sm:$0xff]
    %v150 = vld [vmem:[#allocation2 + $0x178] sm:$0xff]
    %v151 = vld [vmem:[#allocation2 + $0x180] sm:$0xff]
    %v152 = vld [vmem:[#allocation2 + $0x188] sm:$0xff]
    %v153 = vld [vmem:[#allocation2 + $0x190] sm:$0xff]
    %v154 = vld [vmem:[#allocation2 + $0x198] sm:$0xff]
    %v155 = vld [vmem:[#allocation2 + $0x1a0] sm:$0xff]
    %v156 = vld [vmem:[#allocation2 + $0x1a8] sm:$0xff]
    %v157 = vld [vmem:[#allocation2 + $0x1b0] sm:$0xff]
    %v158 = vld [vmem:[#allocation2 + $0x1b8] sm:$0xff]
    %v159 = vld [vmem:[#allocation2 + $0x1c0] sm:$0xff]
    %v160 = vld [vmem:[#allocation2 + $0x1c8] sm:$0xff]
    %v161 = vld [vmem:[#allocation2 + $0x1d0] sm:$0xff]
    %v162 = vld [vmem:[#allocation2 + $0x1d8] sm:$0xff]
    %v163 = vld [vmem:[#allocation2 + $0x1e0] sm:$0xff]
    %v164 = vld [vmem:[#allocation2 + $0x1e8] sm:$0xff]
    %v165 = vld [vmem:[#allocation2 + $0x1f0] sm:$0xff]
    %v166 = vld [vmem:[#allocation2 + $0x1f8] sm:$0xff]
    %v167 = vld [vmem:[#allocation2 + $0x200] sm:$0xff]
    %v168 = vld [vmem:[#allocation2 + $0x208] sm:$0xff]
    %v169 = vld [vmem:[#allocation2 + $0x210] sm:$0xff]
    %v170 = vld [vmem:[#allocation2 + $0x218] sm:$0xff]
    %v171 = vld [vmem:[#allocation2 + $0x220] sm:$0xff]
    %v172 = vld [vmem:[#allocation2 + $0x228] sm:$0xff]
    %v173 = vld [vmem:[#allocation2 + $0x230] sm:$0xff]
    %v174 = vld [vmem:[#allocation2 + $0x238] sm:$0xff]
    %v175 = vld [vmem:[#allocation2 + $0x240] sm:$0xff]
    %v176 = vld [vmem:[#allocation2 + $0x248] sm:$0xff]
    %v177 = vld [vmem:[#allocation2 + $0x250] sm:$0xff]
    %v178 = vld [vmem:[#allocation2 + $0x258] sm:$0xff]
    %v179 = vld [vmem:[#allocation2 + $0x260] sm:$0xff]
    %v180 = vld [vmem:[#allocation2 + $0x268] sm:$0xff]
    %v181 = vld [vmem:[#allocation2 + $0x270] sm:$0xff]
    %v182 = vld [vmem:[#allocation2 + $0x278] sm:$0xff]
    %v183 = vld [vmem:[#allocation2 + $0x280] sm:$0xff]
    %v184 = vld [vmem:[#allocation2 + $0x288] sm:$0xff]
    %v185 = vld [vmem:[#allocation2 + $0x290] sm:$0xff]
    %v186 = vld [vmem:[#allocation2 + $0x298] sm:$0xff]
    %v187 = vld [vmem:[#allocation2 + $0x2a0] sm:$0xff]
    %v188 = vld [vmem:[#allocation2 + $0x2a8] sm:$0xff]
    %v189 = vld [vmem:[#allocation2 + $0x2b0] sm:$0xff]
    %v190 = vld [vmem:[#allocation2 + $0x2b8] sm:$0xff]
    %v191 = vld [vmem:[#allocation2 + $0x2c0] sm:$0xff]
    %v192 = vld [vmem:[#allocation2 + $0x2c8] sm:$0xff]
    %v193 = vld [vmem:[#allocation2 + $0x2d0] sm:$0xff]
    %v194 = vld [vmem:[#allocation2 + $0x2d8] sm:$0xff]
    %v195 = vld [vmem:[#allocation2 + $0x2e0] sm:$0xff]
    %v196 = vld [vmem:[#allocation2 + $0x2e8] sm:$0xff]
    %v197 = vld [vmem:[#allocation2 + $0x2f0] sm:$0xff]
    %v198 = vld [vmem:[#allocation2 + $0x2f8] sm:$0xff]
    %v199 = vld [vmem:[#allocation2 + $0x300] sm:$0xff]
    %v200 = vld [vmem:[#allocation2 + $0x308] sm:$0xff]
    %v201 = vld [vmem:[%s3] sm:$0x1]
    %v203 = vlaneseq
    %v204 = vshrl.u32 %v203, 7
    %v205 = vsub.s32 0, %v204
    %v206 = vrot.slane %v201, %v205
    %vm208 = vcmask 130048
    %v210 = vsel %vm208, %v102, 0
    %212 = vmatprep.subr.mxu0 0.0
    %213 = vmatpush1.msra.mxu0 %v103
    %214 = vmatprep.subr.mxu0 0.0
    %215 = vmatpush1.msra.mxu0 %v104
    %216 = vmatprep.subr.mxu0 0.0
    %217 = vmatpush1.msra.mxu0 %v105
    %218 = vmatprep.subr.mxu0 0.0
    %219 = vmatpush1.msra.mxu0 %v106
    %220 = vmatprep.subr.mxu0 0.0
    %221 = vmatpush1.msra.mxu0 %v107
    %222 = vmatprep.subr.mxu0 0.0
    %223 = vmatpush1.msra.mxu0 %v108
    %224 = vmatprep.subr.mxu0 0.0
    %225 = vmatpush1.msra.mxu0 %v109
    %226 = vmatprep.subr.mxu0 0.0
    %227 = vmatpush1.msra.mxu0 %v110
    %228 = vmatprep.subr.mxu0 0.0
    %229 = vmatpush1.msra.mxu0 %v111
    %230 = vmatprep.subr.mxu0 0.0
    %231 = vmatpush1.msra.mxu0 %v112
    %232 = vmatprep.subr.mxu0 0.0
    %233 = vmatpush1.msra.mxu0 %v113
    %234 = vmatprep.subr.mxu0 0.0
    %235 = vmatpush1.msra.mxu0 %v114
    %236 = vmatprep.subr.mxu0 0.0
    %237 = vmatpush1.msra.mxu0 %v115
    %238 = vmatprep.subr.mxu0 0.0
    %239 = vmatpush1.msra.mxu0 %v116
    %240 = vmatprep.subr.mxu0 0.0
    %241 = vmatpush1.msra.mxu0 %v117
    %242 = vmatprep.subr.mxu0 0.0
    %243 = vmatpush1.msra.mxu0 %v118
    %244 = vmatprep.subr.mxu0 0.0
    %245 = vmatpush1.msra.mxu0 %v119
    %246 = vmatprep.subr.mxu0 0.0
    %247 = vmatpush1.msra.mxu0 %v120
    %248 = vmatprep.subr.mxu0 0.0
    %249 = vmatpush1.msra.mxu0 %v121
    %250 = vmatprep.subr.mxu0 0.0
    %251 = vmatpush1.msra.mxu0 %v122
    %252 = vmatprep.subr.mxu0 0.0
    %253 = vmatpush1.msra.mxu0 %v123
    %254 = vmatprep.subr.mxu0 0.0
    %255 = vmatpush1.msra.mxu0 %v124
    %256 = vmatprep.subr.mxu0 0.0
    %257 = vmatpush1.msra.mxu0 %v125
    %258 = vmatprep.subr.mxu0 0.0
    %259 = vmatpush1.msra.mxu0 %v126
    %260 = vmatprep.subr.mxu0 0.0
    %261 = vmatpush1.msra.mxu0 %v127
    %262 = vmatprep.subr.mxu0 0.0
    %263 = vmatpush1.msra.mxu0 %v128
    %264 = vmatprep.subr.mxu0 0.0
    %265 = vmatpush1.msra.mxu0 %v129
    %266 = vmatprep.subr.mxu0 0.0
    %267 = vmatpush1.msra.mxu0 %v130
    %268 = vmatprep.subr.mxu0 0.0
    %269 = vmatpush1.msra.mxu0 %v131
    %270 = vmatprep.subr.mxu0 0.0
    %271 = vmatpush1.msra.mxu0 %v132
    %272 = vmatprep.subr.mxu0 0.0
    %273 = vmatpush1.msra.mxu0 %v133
    %274 = vmatprep.subr.mxu0 0.0
    %275 = vmatpush1.msra.mxu0 %v134
    %276 = vmatprep.mubr.f32.mxu0 %v97
    %277 = vmatmul.mubr.f32.gmra.mrb[0].mxu0 %v96
    %v278 = vpop.f32.mrb[0].mxu0
    %v279 = vadd.f32 %v206, %v278
    %v280 = vpop.f32.mrb[0].mxu0
    %281 = vdwg.mxu0
    %282 = vmatprep.subr.mxu0 0.0
    %283 = vmatpush1.msra.mxu0 %v135
    %284 = vmatprep.subr.mxu0 0.0
    %285 = vmatpush1.msra.mxu0 %v136
    %286 = vmatprep.subr.mxu0 0.0
    %287 = vmatpush1.msra.mxu0 %v137
    %288 = vmatprep.subr.mxu0 0.0
    %289 = vmatpush1.msra.mxu0 %v138
    %290 = vmatprep.subr.mxu0 0.0
    %291 = vmatpush1.msra.mxu0 %v139
    %292 = vmatprep.subr.mxu0 0.0
    %293 = vmatpush1.msra.mxu0 %v140
    %294 = vmatprep.subr.mxu0 0.0
    %295 = vmatpush1.msra.mxu0 %v141
    %296 = vmatprep.subr.mxu0 0.0
    %297 = vmatpush1.msra.mxu0 %v142
    %298 = vmatprep.subr.mxu0 0.0
    %299 = vmatpush1.msra.mxu0 %v143
    %300 = vmatprep.subr.mxu0 0.0
    %301 = vmatpush1.msra.mxu0 %v144
    %302 = vmatprep.subr.mxu0 0.0
    %303 = vmatpush1.msra.mxu0 %v145
    %304 = vmatprep.subr.mxu0 0.0
    %305 = vmatpush1.msra.mxu0 %v146
    %306 = vmatprep.subr.mxu0 0.0
    %307 = vmatpush1.msra.mxu0 %v147
    %308 = vmatprep.subr.mxu0 0.0
    %309 = vmatpush1.msra.mxu0 %v148
    %310 = vmatprep.subr.mxu0 0.0
    %311 = vmatpush1.msra.mxu0 %v149
    %312 = vmatprep.subr.mxu0 0.0
    %313 = vmatpush1.msra.mxu0 %v150
    %314 = vmatprep.subr.mxu0 0.0
    %315 = vmatpush1.msra.mxu0 %v151
    %316 = vmatprep.subr.mxu0 0.0
    %317 = vmatpush1.msra.mxu0 %v152
    %318 = vmatprep.subr.mxu0 0.0
    %319 = vmatpush1.msra.mxu0 %v153
    %320 = vmatprep.subr.mxu0 0.0
    %321 = vmatpush1.msra.mxu0 %v154
    %322 = vmatprep.subr.mxu0 0.0
    %323 = vmatpush1.msra.mxu0 %v155
    %324 = vmatprep.subr.mxu0 0.0
    %325 = vmatpush1.msra.mxu0 %v156
    %326 = vmatprep.subr.mxu0 0.0
    %327 = vmatpush1.msra.mxu0 %v157
    %328 = vmatprep.subr.mxu0 0.0
    %329 = vmatpush1.msra.mxu0 %v158
    %330 = vmatprep.subr.mxu0 0.0
    %331 = vmatpush1.msra.mxu0 %v159
    %332 = vmatprep.subr.mxu0 0.0
    %333 = vmatpush1.msra.mxu0 %v160
    %334 = vmatprep.subr.mxu0 0.0
    %335 = vmatpush1.msra.mxu0 %v161
    %336 = vmatprep.subr.mxu0 0.0
    %337 = vmatpush1.msra.mxu0 %v162
    %338 = vmatprep.subr.mxu0 0.0
    %339 = vmatpush1.msra.mxu0 %v163
    %340 = vmatprep.subr.mxu0 0.0
    %341 = vmatpush1.msra.mxu0 %v164
    %342 = vmatprep.subr.mxu0 0.0
    %343 = vmatpush1.msra.mxu0 %v165
    %344 = vmatprep.subr.mxu0 0.0
    %345 = vmatpush1.msra.mxu0 %v166
    %346 = vmatprep.mubr.f32.mxu0 %v99
    %347 = vmatmul.mubr.f32.gmra.mrb[0].mxu0 %v98
    %v348 = vpop.f32.mrb[0].mxu0
    %v349 = vadd.f32 %v279, %v348
    %v350 = vpop.f32.mrb[0].mxu0
    %351 = vdwg.mxu0
    %352 = vmatprep.subr.mxu0 0.0
    %353 = vmatpush1.msra.mxu0 %v167
    %354 = vmatprep.subr.mxu0 0.0
    %355 = vmatpush1.msra.mxu0 %v168
    %356 = vmatprep.subr.mxu0 0.0
    %357 = vmatpush1.msra.mxu0 %v169
    %358 = vmatprep.subr.mxu0 0.0
    %359 = vmatpush1.msra.mxu0 %v170
    %360 = vmatprep.subr.mxu0 0.0
    %361 = vmatpush1.msra.mxu0 %v171
    %362 = vmatprep.subr.mxu0 0.0
    %363 = vmatpush1.msra.mxu0 %v172
    %364 = vmatprep.subr.mxu0 0.0
    %365 = vmatpush1.msra.mxu0 %v173
    %366 = vmatprep.subr.mxu0 0.0
    %367 = vmatpush1.msra.mxu0 %v174
    %368 = vmatprep.subr.mxu0 0.0
    %369 = vmatpush1.msra.mxu0 %v175
    %370 = vmatprep.subr.mxu0 0.0
    %371 = vmatpush1.msra.mxu0 %v176
    %372 = vmatprep.subr.mxu0 0.0
    %373 = vmatpush1.msra.mxu0 %v177
    %374 = vmatprep.subr.mxu0 0.0
    %375 = vmatpush1.msra.mxu0 %v178
    %376 = vmatprep.subr.mxu0 0.0
    %377 = vmatpush1.msra.mxu0 %v179
    %378 = vmatprep.subr.mxu0 0.0
    %379 = vmatpush1.msra.mxu0 %v180
    %380 = vmatprep.subr.mxu0 0.0
    %381 = vmatpush1.msra.mxu0 %v181
    %382 = vmatprep.subr.mxu0 0.0
    %383 = vmatpush1.msra.mxu0 %v182
    %384 = vmatprep.subr.mxu0 0.0
    %385 = vmatpush1.msra.mxu0 %v183
    %386 = vmatprep.subr.mxu0 0.0
    %387 = vmatpush1.msra.mxu0 %v184
    %388 = vmatprep.subr.mxu0 0.0
    %389 = vmatpush1.msra.mxu0 %v185
    %390 = vmatprep.subr.mxu0 0.0
    %391 = vmatpush1.msra.mxu0 %v186
    %392 = vmatprep.subr.mxu0 0.0
    %393 = vmatpush1.msra.mxu0 %v187
    %394 = vmatprep.subr.mxu0 0.0
    %395 = vmatpush1.msra.mxu0 %v188
    %396 = vmatprep.subr.mxu0 0.0
    %397 = vmatpush1.msra.mxu0 %v189
    %398 = vmatprep.subr.mxu0 0.0
    %399 = vmatpush1.msra.mxu0 %v190
    %400 = vmatprep.subr.mxu0 0.0
    %401 = vmatpush1.msra.mxu0 %v191
    %402 = vmatprep.subr.mxu0 0.0
    %403 = vmatpush1.msra.mxu0 %v192
    %404 = vmatprep.subr.mxu0 0.0
    %405 = vmatpush1.msra.mxu0 %v193
    %406 = vmatprep.subr.mxu0 0.0
    %407 = vmatpush1.msra.mxu0 %v194
    %408 = vmatprep.subr.mxu0 0.0
    %409 = vmatpush1.msra.mxu0 %v195
    %410 = vmatprep.subr.mxu0 0.0
    %411 = vmatpush1.msra.mxu0 %v196
    %412 = vmatprep.subr.mxu0 0.0
    %413 = vmatpush1.msra.mxu0 %v197
    %414 = vmatprep.subr.mxu0 0.0
    %415 = vmatpush1.msra.mxu0 %v198
    %416 = vmatprep.mubr.f32.mxu0 %v101
    %417 = vmatmul.mubr.f32.gmra.mrb[0].mxu0 %v100
    %v418 = vpop.f32.mrb[0].mxu0
    %v419 = vadd.f32 %v349, %v418
    %v420 = vpop.f32.mrb[0].mxu0
    %421 = vdwg.mxu0
    %422 = vmatprep.subr.mxu0 0.0
    %423 = vmatpush1.msra.mxu0 %v199
    %424 = vmatprep.subr.mxu0 0.0
    %425 = vmatpush1.msra.mxu0 %v200
    %426 = vmatprep.subr.mxu0 0.0
    %427 = vmatpush1.msra.mxu0 0.0
    %428 = vmatprep.subr.mxu0 0.0
    %429 = vmatpush1.msra.mxu0 0.0
    %430 = vmatprep.subr.mxu0 0.0
    %431 = vmatpush1.msra.mxu0 0.0
    %432 = vmatprep.subr.mxu0 0.0
    %433 = vmatpush1.msra.mxu0 0.0
    %434 = vmatprep.subr.mxu0 0.0
    %435 = vmatpush1.msra.mxu0 0.0
    %436 = vmatprep.subr.mxu0 0.0
    %437 = vmatpush1.msra.mxu0 0.0
    %438 = vmatprep.subr.mxu0 0.0
    %439 = vmatpush1.msra.mxu0 0.0
    %440 = vmatprep.subr.mxu0 0.0
    %441 = vmatpush1.msra.mxu0 0.0
    %442 = vmatprep.subr.mxu0 0.0
    %443 = vmatpush1.msra.mxu0 0.0
    %444 = vmatprep.subr.mxu0 0.0
    %445 = vmatpush1.msra.mxu0 0.0
    %446 = vmatprep.subr.mxu0 0.0
    %447 = vmatpush1.msra.mxu0 0.0
    %448 = vmatprep.subr.mxu0 0.0
    %449 = vmatpush1.msra.mxu0 0.0
    %450 = vmatprep.subr.mxu0 0.0
    %451 = vmatpush1.msra.mxu0 0.0
    %452 = vmatprep.subr.mxu0 0.0
    %453 = vmatpush1.msra.mxu0 0.0
    %454 = vmatprep.subr.mxu0 0.0
    %455 = vmatpush1.msra.mxu0 0.0
    %456 = vmatprep.subr.mxu0 0.0
    %457 = vmatpush1.msra.mxu0 0.0
    %458 = vmatprep.subr.mxu0 0.0
    %459 = vmatpush1.msra.mxu0 0.0
    %460 = vmatprep.subr.mxu0 0.0
    %461 = vmatpush1.msra.mxu0 0.0
    %462 = vmatprep.subr.mxu0 0.0
    %463 = vmatpush1.msra.mxu0 0.0
    %464 = vmatprep.subr.mxu0 0.0
    %465 = vmatpush1.msra.mxu0 0.0
    %466 = vmatprep.subr.mxu0 0.0
    %467 = vmatpush1.msra.mxu0 0.0
    %468 = vmatprep.subr.mxu0 0.0
    %469 = vmatpush1.msra.mxu0 0.0
    %470 = vmatprep.subr.mxu0 0.0
    %471 = vmatpush1.msra.mxu0 0.0
    %472 = vmatprep.subr.mxu0 0.0
    %473 = vmatpush1.msra.mxu0 0.0
    %474 = vmatprep.subr.mxu0 0.0
    %475 = vmatpush1.msra.mxu0 0.0
    %476 = vmatprep.subr.mxu0 0.0
    %477 = vmatpush1.msra.mxu0 0.0
    %478 = vmatprep.subr.mxu0 0.0
    %479 = vmatpush1.msra.mxu0 0.0
    %480 = vmatprep.subr.mxu0 0.0
    %481 = vmatpush1.msra.mxu0 0.0
    %482 = vmatprep.subr.mxu0 0.0
    %483 = vmatpush1.msra.mxu0 0.0
    %484 = vmatprep.subr.mxu0 0.0
    %485 = vmatpush1.msra.mxu0 0.0
    %486 = vmatprep.mubr.f32.mxu0 0.0
    %487 = vmatmul.mubr.f32.gmra.mrb[0].mxu0 %v210
    %v488 = vpop.f32.mrb[0].mxu0
    %v489 = vadd.f32 %v419, %v488
    %v490 = vpop.f32.mrb[0].mxu0
    %491 = vdwg.mxu0
    %v492 = vmax.f32 %v489, 0.0
    %v493 = vld [vmem:[%s4] sm:$0xff]
    %v494 = vld [vmem:[%s4 + $0x8] sm:$0xff]
    %v495 = vld [vmem:[%s4 + $0x10] sm:$0xff]
    %v496 = vld [vmem:[%s4 + $0x18] sm:$0xff]
    %v497 = vld [vmem:[%s4 + $0x20] sm:$0xff]
    %v498 = vld [vmem:[%s4 + $0x28] sm:$0xff]
    %v499 = vld [vmem:[%s4 + $0x30] sm:$0xff]
    %v500 = vld [vmem:[%s4 + $0x38] sm:$0xff]
    %v501 = vld [vmem:[%s4 + $0x40] sm:$0xff]
    %v502 = vld [vmem:[%s4 + $0x48] sm:$0xff]
    %v503 = vld [vmem:[%s4 + $0x50] sm:$0xff]
    %v504 = vld [vmem:[%s4 + $0x58] sm:$0xff]
    %v505 = vld [vmem:[%s4 + $0x60] sm:$0xff]
    %v506 = vld [vmem:[%s4 + $0x68] sm:$0xff]
    %v507 = vld [vmem:[%s4 + $0x70] sm:$0xff]
    %v508 = vld [vmem:[%s4 + $0x78] sm:$0xff]
    %v509 = vld [vmem:[%s5] sm:$0x1]
    %v511 = vlaneseq
    %v512 = vshrl.u32 %v511, 7
    %v513 = vsub.s32 0, %v512
    %v514 = vrot.slane %v509, %v513
    %516 = vmatprep.subr.mxu0 0.0
    %517 = vmatpush1.msra.mxu0 %v493
    %518 = vmatprep.subr.mxu0 0.0
    %519 = vmatpush1.msra.mxu0 %v494
    %520 = vmatprep.subr.mxu0 0.0
    %521 = vmatpush1.msra.mxu0 %v495
    %522 = vmatprep.subr.mxu0 0.0
    %523 = vmatpush1.msra.mxu0 %v496
    %524 = vmatprep.subr.mxu0 0.0
    %525 = vmatpush1.msra.mxu0 %v497
    %526 = vmatprep.subr.mxu0 0.0
    %527 = vmatpush1.msra.mxu0 %v498
    %528 = vmatprep.subr.mxu0 0.0
    %529 = vmatpush1.msra.mxu0 %v499
    %530 = vmatprep.subr.mxu0 0.0
    %531 = vmatpush1.msra.mxu0 %v500
    %532 = vmatprep.subr.mxu0 0.0
    %533 = vmatpush1.msra.mxu0 %v501
    %534 = vmatprep.subr.mxu0 0.0
    %535 = vmatpush1.msra.mxu0 %v502
    %536 = vmatprep.subr.mxu0 0.0
    %537 = vmatpush1.msra.mxu0 %v503
    %538 = vmatprep.subr.mxu0 0.0
    %539 = vmatpush1.msra.mxu0 %v504
    %540 = vmatprep.subr.mxu0 0.0
    %541 = vmatpush1.msra.mxu0 %v505
    %542 = vmatprep.subr.mxu0 0.0
    %543 = vmatpush1.msra.mxu0 %v506
    %544 = vmatprep.subr.mxu0 0.0
    %545 = vmatpush1.msra.mxu0 %v507
    %546 = vmatprep.subr.mxu0 0.0
    %547 = vmatpush1.msra.mxu0 %v508
    %548 = vmatprep.subr.mxu0 0.0
    %549 = vmatpush1.msra.mxu0 0.0
    %550 = vmatprep.subr.mxu0 0.0
    %551 = vmatpush1.msra.mxu0 0.0
    %552 = vmatprep.subr.mxu0 0.0
    %553 = vmatpush1.msra.mxu0 0.0
    %554 = vmatprep.subr.mxu0 0.0
    %555 = vmatpush1.msra.mxu0 0.0
    %556 = vmatprep.subr.mxu0 0.0
    %557 = vmatpush1.msra.mxu0 0.0
    %558 = vmatprep.subr.mxu0 0.0
    %559 = vmatpush1.msra.mxu0 0.0
    %560 = vmatprep.subr.mxu0 0.0
    %561 = vmatpush1.msra.mxu0 0.0
    %562 = vmatprep.subr.mxu0 0.0
    %563 = vmatpush1.msra.mxu0 0.0
    %564 = vmatprep.subr.mxu0 0.0
    %565 = vmatpush1.msra.mxu0 0.0
    %566 = vmatprep.subr.mxu0 0.0
    %567 = vmatpush1.msra.mxu0 0.0
    %568 = vmatprep.subr.mxu0 0.0
    %569 = vmatpush1.msra.mxu0 0.0
    %570 = vmatprep.subr.mxu0 0.0
    %571 = vmatpush1.msra.mxu0 0.0
    %572 = vmatprep.subr.mxu0 0.0
    %573 = vmatpush1.msra.mxu0 0.0
    %574 = vmatprep.subr.mxu0 0.0
    %575 = vmatpush1.msra.mxu0 0.0
    %576 = vmatprep.subr.mxu0 0.0
    %577 = vmatpush1.msra.mxu0 0.0
    %578 = vmatprep.subr.mxu0 0.0
    %579 = vmatpush1.msra.mxu0 0.0
    %580 = vmatprep.mubr.f32.mxu0 0.0
    %581 = vmatmul.mubr.f32.gmra.mrb[0].mxu0 %v492
    %v582 = vpop.f32.mrb[0].mxu0
    %v583 = vadd.f32 %v514, %v582
    %v584 = vpop.f32.mrb[0].mxu0
    %585 = vdwg.mxu0
    %vm586 = vcmask 80896
    %587 = vst.msk [vmem:[#allocation5] sm:$0xff] %vm586, %v583
    // Predicated region
    $region30: #{tpu_custom_call.1} parent=1 // pred_check
      _
    $region31: #{tpu_custom_call.1} parent=1 // pred_check_branch
      %589 = sbr.rel (0) target = $region33
    $region32: #{tpu_custom_call.1} parent=1 // pred_region
      %s591 = ssub.s32 128, 128
      %592 = vsyncadd [#allocation4], %s591
      %s594 = sshll.u32 [#allocation5], 4
      %s595 = int_to_ptr.vmem [resolvable:$true] %s594
      %597 = dma.vmem_to_hbm [thread:$0]  %s595, 128, %s6, [#allocation4]
    $region33: #{tpu_custom_call.1} parent=1 // pred_fallthru
      _
    // Predicated region
    $region34: #{tpu_custom_call.1} parent=1 // pred_check
      _
    $region35: #{tpu_custom_call.1} parent=1 // pred_check_branch
      %599 = sbr.rel (0) target = $region37
    $region36: #{tpu_custom_call.1} parent=1 // pred_region
      %600 = dma.done [#allocation4], 128
    $region37: #{tpu_custom_call.1} parent=1 // pred_fallthru
      _
    %601 = vsyncpa [#allocation3], 1
    %602 = vsyncpa [#allocation4], 1

</llo_original>
